<compile_context>
chip_gen: v6e
topology: v6e:2x2x1
jax: 0.10.0
libtpu: 0.0.40
codegen_flags: <defaults>
</compile_context>

<pallas_src>
import functools

import jax
import jax.numpy as jnp
from jax import lax
from jax.experimental import pallas as pl
from jax.experimental.pallas import tpu as pltpu

LANE = 128
SUBLANE = 8


def _round_up(x: int, m: int) -> int:
    return ((x + m - 1) // m) * m


def _cdiv(a: int, b: int) -> int:
    return -(-a // b)


def _pick_tile(n_rows, row_bytes, max_tile, min_split_bytes=2 << 20):
    """Row-tile selection (multiple of 8, never larger than the array).

    Biggest tile bounded by `max_tile` (per-step overhead ~0.35 us; the
    per-tile working sets here are tiny vs VMEM on v5e/v6e/v7x).  A single-step
    grid is only split into two steps (v7x megacore) when each half still moves
    >= min_split_bytes; on single-TC v5e/v6e an extra tiny step is pure
    overhead.
    """
    cap = max(SUBLANE, (n_rows // SUBLANE) * SUBLANE)
    tile = min(max(SUBLANE, _round_up(max_tile, SUBLANE)), cap)
    if _cdiv(n_rows, tile) < 2:
        half = _round_up(_cdiv(n_rows, 2), SUBLANE)
        if half < tile and half * row_bytes >= min_split_bytes:
            tile = half
    return tile


# -----------------------------------------------------------------------------
# ForceLoss: example-averaged Frobenius (MSE) force-matching loss (standalone).
# -----------------------------------------------------------------------------
def _sq_diff_partial_kernel(f_ref, l_ref, p_ref, *, tile, rows):
    """One lane-dense (tile,128) block -> one (8,128) partial-sum vreg."""
    d = f_ref[...] - l_ref[...]
    sq = d * d
    if _cdiv(rows, tile) * tile != rows:
        # Ragged final block: rows past `rows` come from out-of-bounds reads
        # with unspecified values -> select them out.  `rows`/`tile` are
        # trace-time Python ints, so this costs one iota + select only when a
        # partial block actually exists.
        row_id = pl.program_id(0) * tile + lax.broadcasted_iota(
            jnp.int32, (tile, LANE), 0)
        sq = jnp.where(row_id < rows, sq, 0.0)
    # Regroup whole (8,128) vregs and add them elementwise (pure VPU work).
    p_ref[...] = jnp.sum(sq.reshape(tile // SUBLANE, SUBLANE, LANE), axis=0)


@functools.partial(jax.jit, static_argnames=("tile_rows",))
def force_loss(force, labels, *, tile_rows=4096):
    """Matches torch ForceLoss: ((force - labels) ** 2).mean().

    No full-array pad copy: aligned inputs reach the kernel through free
    bitcast reshapes; only the <128-element lane tail is summed in XLA.
    """
    assert force.shape == labels.shape
    total = force.size
    f = force.reshape(-1).astype(jnp.float32)
    l = labels.reshape(-1).astype(jnp.float32)

    rem = total % LANE              # lane tail, handled outside the kernel
    main = total - rem
    rows = main // LANE

    tail = jnp.float32(0.0)
    if rem:
        dt = f[main:] - l[main:]
        tail = jnp.sum(dt * dt)

    if rows < SUBLANE:
        # Not even one aligned (8,128) vreg of data: pure XLA (a kernel launch
        # would be pure overhead).
        if main:
            dm = f[:main] - l[:main]
            tail = tail + jnp.sum(dm * dm)
        return tail / jnp.float32(total)

    # Free reshape when rem == 0; only the (rare) lane-ragged case pays for a
    # prefix slice of the main portion.
    f2d = (f if rem == 0 else f[:main]).reshape(rows, LANE)
    l2d = (l if rem == 0 else l[:main]).reshape(rows, LANE)

    tile = _pick_tile(rows, row_bytes=2 * LANE * 4, max_tile=tile_rows)
    n_tiles = _cdiv(rows, tile)

    partials = pl.pallas_call(
        functools.partial(_sq_diff_partial_kernel, tile=tile, rows=rows),
        out_shape=jax.ShapeDtypeStruct((n_tiles * SUBLANE, LANE), jnp.float32),
        grid=(n_tiles,),
        in_specs=[
            pl.BlockSpec((tile, LANE), lambda i: (i, 0)),
            pl.BlockSpec((tile, LANE), lambda i: (i, 0)),
        ],
        out_specs=pl.BlockSpec((SUBLANE, LANE), lambda i: (i, 0)),
        compiler_params=pltpu.CompilerParams(
            dimension_semantics=("parallel",)),
    )(f2d, l2d)

    # Tiny final reduction in XLA; divide by the true element count.
    return (jnp.sum(partials) + tail) / jnp.float32(total)


# -----------------------------------------------------------------------------
# CGnet energy/force producer (feature=None, priors=None): tanh MLP forward +
# analytic backward (force = -d(sum(energy))/dx), optionally fused with the
# ForceLoss partial sums.
# -----------------------------------------------------------------------------
def _mlp_energy_force(x, w1, b1, w2, b2, w3_row, b3, w1t, w2t, *, want_energy):
    """Tanh-MLP forward + analytic backward for one row tile of frames."""
    # TODO(synk): on v6e/v7x cast the matmul operands to bf16 (keep f32
    # accumulation and elementwise math) once validated against tolerances.
    h1 = jnp.tanh(jnp.dot(x, w1, preferred_element_type=jnp.float32) + b1)
    h2 = jnp.tanh(jnp.dot(h1, w2, preferred_element_type=jnp.float32) + b2)
    energy = None
    if want_energy:
        # A (TN,H)x(H,1) matmul would be a 1-useful-column MXU pass; do it on
        # the VPU/XLU instead and keep the MXU slot for the real matmuls.
        energy = jnp.sum(h2 * w3_row, axis=-1, keepdims=True) + b3
    g_a2 = (1.0 - h2 * h2) * w3_row          # implicit (1,H) broadcast
    g_h1 = jnp.dot(g_a2, w2t, preferred_element_type=jnp.float32)
    g_a1 = (1.0 - h1 * h1) * g_h1
    force = -jnp.dot(g_a1, w1t, preferred_element_type=jnp.float32)
    return energy, force


def cgnet_energy_force_kernel(x_ref, w1_ref, b1_ref, w2_ref, b2_ref,
                              w3r_ref, b3_ref, w1t_ref, w2t_ref,
                              e_ref, f_ref):
    """Analysis path: energy + force outputs."""
    energy, force = _mlp_energy_force(
        x_ref[...], w1_ref[...], b1_ref[...], w2_ref[...], b2_ref[...],
        w3r_ref[...], b3_ref[...], w1t_ref[...], w2t_ref[...],
        want_energy=True)
    # TODO(synk): lane-dense (tile*D//128,128) force / (tile//128,128) energy
    # out_specs would turn these partially masked vst into full-lane stores
    # (biggest relative win on v5e's single store slot); needs an in-kernel
    # XLU relayout -- measure before adopting.
    e_ref[...] = energy
    f_ref[...] = force


def cgnet_force_loss_kernel(x_ref, y_ref, w1_ref, b1_ref, w2_ref, b2_ref,
                            w3r_ref, b3_ref, w1t_ref, w2t_ref,
                            f_ref, p_ref, *, tile, n_valid):
    """Fused training path: force + ForceLoss partials, no energy store."""
    _, force = _mlp_energy_force(
        x_ref[...], w1_ref[...], b1_ref[...], w2_ref[...], b2_ref[...],
        w3r_ref[...], b3_ref[...], w1t_ref[...], w2t_ref[...],
        want_energy=False)
    f_ref[...] = force
    d = force - y_ref[...]
    sq = d * d
    if _cdiv(n_valid, tile) * tile != n_valid:
        # Padded / out-of-bounds frames of the ragged final block must not
        # leak into the loss sum (n_valid and tile are trace-time constants).
        row_id = pl.program_id(0) * tile + lax.broadcasted_iota(
            jnp.int32, sq.shape, 0)
        sq = jnp.where(row_id < n_valid, sq, 0.0)
    # One (8, D) partial per grid step; the final tiny reduction is in XLA.
    p_ref[...] = jnp.sum(
        sq.reshape(tile // SUBLANE, SUBLANE, sq.shape[-1]), axis=0)


def _weight_specs(d, h):
    full = lambda i: (0, 0)
    return [
        pl.BlockSpec((d, h), full),   # W1
        pl.BlockSpec((1, h), full),   # b1
        pl.BlockSpec((h, h), full),   # W2
        pl.BlockSpec((1, h), full),   # b2
        pl.BlockSpec((1, h), full),   # W3 as a row
        pl.BlockSpec((1, 1), full),   # b3
        pl.BlockSpec((h, d), full),   # W1^T
        pl.BlockSpec((h, h), full),   # W2^T
    ]


def _prep_inputs(coords, w1, w2, w3):
    n, d = coords.shape
    h = w1.shape[1]
    # Grid-invariant weight views prepared once here, never per grid step.
    w3_row, w1t, w2t = w3.reshape(1, h), w1.T, w2.T
    n8 = _round_up(n, SUBLANE)
    x = coords.astype(jnp.float32)
    if n8 != n:
        # Only a non sublane-aligned frame count pays for a (tiny) pad; the
        # aligned path feeds coords straight to the kernel (no full-array pad).
        x = jnp.pad(x, ((0, n8 - n), (0, 0)))
    return x, n, d, h, n8, w3_row, w1t, w2t


@functools.partial(jax.jit, static_argnames=("tile_n",))
def cgnet_forward(coords, w1, b1, w2, b2, w3, b3, *, tile_n=4096):
    """CGnet (feature=None, priors=None): returns (energy, force)."""
    x, n, d, h, n8, w3_row, w1t, w2t = _prep_inputs(coords, w1, w2, w3)
    tile = _pick_tile(n8, row_bytes=4 * d * 4, max_tile=tile_n)
    n_tiles = _cdiv(n8, tile)

    energy, force = pl.pallas_call(
        cgnet_energy_force_kernel,
        out_shape=(jax.ShapeDtypeStruct((n8, 1), jnp.float32),
                   jax.ShapeDtypeStruct((n8, d), jnp.float32)),
        grid=(n_tiles,),
        in_specs=[pl.BlockSpec((tile, d), lambda i: (i, 0))]
                 + _weight_specs(d, h),
        out_specs=(pl.BlockSpec((tile, 1), lambda i: (i, 0)),
                   pl.BlockSpec((tile, d), lambda i: (i, 0))),
        compiler_params=pltpu.CompilerParams(
            dimension_semantics=("parallel",)),
    )(x, w1, b1, w2, b2, w3_row, b3, w1t, w2t)
    if n8 != n:
        energy, force = energy[:n], force[:n]
    return energy, force


@functools.partial(jax.jit, static_argnames=("tile_n",))
def cgnet_force_loss(coords, labels, w1, b1, w2, b2, w3, b3, *, tile_n=4096):
    """Fused training path: the ForceLoss partial sums are produced by the same
    kernel that computes force, so the force never makes an HBM round-trip for
    the loss and there is no second pallas_call / pad copy / energy store.
    Returns (force, loss)."""
    x, n, d, h, n8, w3_row, w1t, w2t = _prep_inputs(coords, w1, w2, w3)
    y = labels.astype(jnp.float32)
    if n8 != n:
        y = jnp.pad(y, ((0, n8 - n), (0, 0)))

    tile = _pick_tile(n8, row_bytes=3 * d * 4, max_tile=tile_n)
    n_tiles = _cdiv(n8, tile)

    force, partials = pl.pallas_call(
        functools.partial(cgnet_force_loss_kernel, tile=tile, n_valid=n),
        out_shape=(jax.ShapeDtypeStruct((n8, d), jnp.float32),
                   jax.ShapeDtypeStruct((n_tiles * SUBLANE, d), jnp.float32)),
        grid=(n_tiles,),
        in_specs=[pl.BlockSpec((tile, d), lambda i: (i, 0)),
                  pl.BlockSpec((tile, d), lambda i: (i, 0))]
                 + _weight_specs(d, h),
        out_specs=(pl.BlockSpec((tile, d), lambda i: (i, 0)),
                   pl.BlockSpec((SUBLANE, d), lambda i: (i, 0))),
        compiler_params=pltpu.CompilerParams(
            dimension_semantics=("parallel",)),
    )(x, y, w1, b1, w2, b2, w3_row, b3, w1t, w2t)

    loss = jnp.sum(partials) / jnp.float32(n * d)
    if n8 != n:
        force = force[:n]
    return force, loss


if __name__ == "__main__":
    key = jax.random.PRNGKey(0)
    n_frames, n_dof, hidden = 64, 16, 32
    ks = jax.random.split(key, 16)

    def linear_init(kw, kb, fan_in, fan_out):
        # torch.nn.Linear default: U(-1/sqrt(fan_in), 1/sqrt(fan_in))
        bound = 1.0 / jnp.sqrt(jnp.float32(fan_in))
        w = jax.random.uniform(kw, (fan_in, fan_out), jnp.float32, -bound, bound)
        b = jax.random.uniform(kb, (1, fan_out), jnp.float32, -bound, bound)
        return w, b

    coords = jax.random.normal(ks[0], (n_frames, n_dof), jnp.float32)
    labels = jax.random.normal(ks[1], (n_frames, n_dof), jnp.float32)
    w1, b1 = linear_init(ks[2], ks[3], n_dof, hidden)
    w2, b2 = linear_init(ks[4], ks[5], hidden, hidden)
    w3, b3 = linear_init(ks[6], ks[7], hidden, 1)

    # Producer: CGnet energy/force (analysis path keeps the energy output).
    energy, force = cgnet_forward(coords, w1, b1, w2, b2, w3, b3)
    # ForceLoss (the spec'd module), standalone, reading the producer's force.
    loss = force_loss(force, labels)
    # Fused training path: loss partials computed inside the producer kernel.
    force_fused, loss_fused = cgnet_force_loss(coords, labels,
                                               w1, b1, w2, b2, w3, b3)
    jax.block_until_ready((energy, force, loss, force_fused, loss_fused))

    # ---- references ---------------------------------------------------------
    def energy_fn(c):
        h1 = jnp.tanh(c @ w1 + b1)
        h2 = jnp.tanh(h1 @ w2 + b2)
        return h2 @ w3 + b3

    def neg_sum_energy(c):
        e = energy_fn(c)
        return -jnp.sum(e), e

    (_, energy_ref), force_ref = jax.value_and_grad(
        neg_sum_energy, has_aux=True)(coords)

    assert energy.shape == (n_frames, 1)
    assert force.shape == (n_frames, n_dof)
    assert jnp.allclose(energy, energy_ref, atol=1e-5, rtol=1e-5)
    assert jnp.allclose(force, force_ref, atol=1e-5, rtol=1e-5)
    assert jnp.allclose(force_fused, force_ref, atol=1e-5, rtol=1e-5)
    assert jnp.allclose(loss, jnp.mean((force - labels) ** 2),
                        atol=1e-5, rtol=1e-5)
    assert jnp.allclose(loss_fused, jnp.mean((force_ref - labels) ** 2),
                        atol=1e-5, rtol=1e-5)

    # Standalone ForceLoss on ragged / non-aligned shapes: exercises the masked
    # final grid step, the lane-tail epilogue, and the small-input fallback.
    for i, shape in enumerate([(100, 64), (20, 70), (37, 9)]):
        fa = jax.random.normal(ks[8 + i], shape, jnp.float32)
        la = fa + 0.25 * jax.random.normal(ks[11 + i], shape, jnp.float32)
        got = force_loss(fa, la)
        jax.block_until_ready(got)
        assert jnp.allclose(got, jnp.mean((fa - la) ** 2),
                            atol=1e-5, rtol=1e-5)

    # Fused path with a non sublane-aligned frame count (tail masked in-kernel).
    c_r = jax.random.normal(ks[14], (37, n_dof), jnp.float32)
    l_r = jax.random.normal(ks[15], (37, n_dof), jnp.float32)
    f_r, loss_r = cgnet_force_loss(c_r, l_r, w1, b1, w2, b2, w3, b3)
    (_, _), f_ref_r = jax.value_and_grad(neg_sum_energy, has_aux=True)(c_r)
    jax.block_until_ready((f_r, loss_r))
    assert jnp.allclose(f_r, f_ref_r, atol=1e-5, rtol=1e-5)
    assert jnp.allclose(loss_r, jnp.mean((f_ref_r - l_r) ** 2),
                        atol=1e-5, rtol=1e-5)

    print("KERNEL_OK")
</pallas_src>

<mosaic_0001>
module attributes {stable_mosaic.version = 11 : i64} {
  func.func @cgnet_energy_force_kernel(%arg0: i32, %arg1: memref<64x16xf32, #tpu.memory_space<vmem>>, %arg2: memref<16x32xf32, #tpu.memory_space<vmem>>, %arg3: memref<1x32xf32, #tpu.memory_space<vmem>>, %arg4: memref<32x32xf32, #tpu.memory_space<vmem>>, %arg5: memref<1x32xf32, #tpu.memory_space<vmem>>, %arg6: memref<1x32xf32, #tpu.memory_space<vmem>>, %arg7: memref<1x1xf32, #tpu.memory_space<vmem>>, %arg8: memref<32x16xf32, #tpu.memory_space<vmem>>, %arg9: memref<32x32xf32, #tpu.memory_space<vmem>>, %arg10: memref<64x1xf32, #tpu.memory_space<vmem>>, %arg11: memref<64x16xf32, #tpu.memory_space<vmem>>) attributes {dimension_semantics = [#tpu.dimension_semantics<parallel>], iteration_bounds = array<i64: 1>, scalar_prefetch = 0 : i64, scratch_operands = 0 : i64, tpu.core_type = #tpu.core_type<tc>, window_params = [{transform_indices = @transform_0, window_bounds = array<i64: 64, 16>}, {pipeline_mode = #tpu.pipeline_mode<synchronous>, transform_indices = @transform_1, window_bounds = array<i64: 16, 32>}, {pipeline_mode = #tpu.pipeline_mode<synchronous>, transform_indices = @transform_2, window_bounds = array<i64: 1, 32>}, {pipeline_mode = #tpu.pipeline_mode<synchronous>, transform_indices = @transform_3, window_bounds = array<i64: 32, 32>}, {pipeline_mode = #tpu.pipeline_mode<synchronous>, transform_indices = @transform_4, window_bounds = array<i64: 1, 32>}, {pipeline_mode = #tpu.pipeline_mode<synchronous>, transform_indices = @transform_5, window_bounds = array<i64: 1, 32>}, {pipeline_mode = #tpu.pipeline_mode<synchronous>, transform_indices = @transform_6, window_bounds = array<i64: 1, 1>}, {pipeline_mode = #tpu.pipeline_mode<synchronous>, transform_indices = @transform_7, window_bounds = array<i64: 32, 16>}, {pipeline_mode = #tpu.pipeline_mode<synchronous>, transform_indices = @transform_8, window_bounds = array<i64: 32, 32>}, {transform_indices = @transform_9, window_bounds = array<i64: 64, 1>}, {transform_indices = @transform_10, window_bounds = array<i64: 64, 16>}]} {
    %c0 = arith.constant 0 : index
    %c0_0 = arith.constant 0 : index
    %0 = vector.load %arg1[%c0, %c0_0] : memref<64x16xf32, #tpu.memory_space<vmem>>, vector<64x16xf32>
    %c0_1 = arith.constant 0 : index
    %c0_2 = arith.constant 0 : index
    %1 = vector.load %arg2[%c0_1, %c0_2] : memref<16x32xf32, #tpu.memory_space<vmem>>, vector<16x32xf32>
    %c0_3 = arith.constant 0 : index
    %c0_4 = arith.constant 0 : index
    %2 = vector.load %arg3[%c0_3, %c0_4] : memref<1x32xf32, #tpu.memory_space<vmem>>, vector<1x32xf32>
    %c0_5 = arith.constant 0 : index
    %c0_6 = arith.constant 0 : index
    %3 = vector.load %arg4[%c0_5, %c0_6] : memref<32x32xf32, #tpu.memory_space<vmem>>, vector<32x32xf32>
    %c0_7 = arith.constant 0 : index
    %c0_8 = arith.constant 0 : index
    %4 = vector.load %arg5[%c0_7, %c0_8] : memref<1x32xf32, #tpu.memory_space<vmem>>, vector<1x32xf32>
    %c0_9 = arith.constant 0 : index
    %c0_10 = arith.constant 0 : index
    %5 = vector.load %arg6[%c0_9, %c0_10] : memref<1x32xf32, #tpu.memory_space<vmem>>, vector<1x32xf32>
    %c0_11 = arith.constant 0 : index
    %c0_12 = arith.constant 0 : index
    %6 = vector.load %arg7[%c0_11, %c0_12] : memref<1x1xf32, #tpu.memory_space<vmem>>, vector<1x1xf32>
    %c0_13 = arith.constant 0 : index
    %c0_14 = arith.constant 0 : index
    %7 = vector.load %arg8[%c0_13, %c0_14] : memref<32x16xf32, #tpu.memory_space<vmem>>, vector<32x16xf32>
    %c0_15 = arith.constant 0 : index
    %c0_16 = arith.constant 0 : index
    %8 = vector.load %arg9[%c0_15, %c0_16] : memref<32x32xf32, #tpu.memory_space<vmem>>, vector<32x32xf32>
    %cst = arith.constant dense<0.000000e+00> : vector<64x32xf32>
    %9 = tpu.matmul %0, %1, %cst {dimension_numbers = #tpu.dot_dimension_numbers<[1], [0], [0], [1], [0, 0, 1, 1], [], []>} : vector<64x16xf32>, vector<16x32xf32>, vector<64x32xf32> -> vector<64x32xf32>
    %10 = vector.broadcast %2 : vector<1x32xf32> to vector<64x32xf32>
    %11 = arith.addf %9, %10 : vector<64x32xf32>
    %12 = math.tanh %11 : vector<64x32xf32>
    %cst_17 = arith.constant dense<0.000000e+00> : vector<64x32xf32>
    %13 = tpu.matmul %12, %3, %cst_17 {dimension_numbers = #tpu.dot_dimension_numbers<[1], [0], [0], [1], [0, 0, 1, 1], [], []>} : vector<64x32xf32>, vector<32x32xf32>, vector<64x32xf32> -> vector<64x32xf32>
    %14 = vector.broadcast %4 : vector<1x32xf32> to vector<64x32xf32>
    %15 = arith.addf %13, %14 : vector<64x32xf32>
    %16 = math.tanh %15 : vector<64x32xf32>
    %17 = vector.broadcast %5 : vector<1x32xf32> to vector<64x32xf32>
    %18 = arith.mulf %16, %17 : vector<64x32xf32>
    %cst_18 = arith.constant dense<0.000000e+00> : vector<64xf32>
    %19 = vector.multi_reduction <add>, %18, %cst_18 [1] : vector<64x32xf32> to vector<64xf32>
    %20 = vector.shape_cast %19 : vector<64xf32> to vector<64x1xf32>
    %21 = vector.broadcast %6 : vector<1x1xf32> to vector<64x1xf32>
    %22 = arith.addf %20, %21 : vector<64x1xf32>
    %23 = arith.mulf %16, %16 : vector<64x32xf32>
    %cst_19 = arith.constant 1.000000e+00 : f32
    %24 = vector.broadcast %cst_19 : f32 to vector<64x32xf32>
    %25 = arith.subf %24, %23 : vector<64x32xf32>
    %26 = vector.broadcast %5 : vector<1x32xf32> to vector<64x32xf32>
    %27 = arith.mulf %25, %26 : vector<64x32xf32>
    %cst_20 = arith.constant dense<0.000000e+00> : vector<64x32xf32>
    %28 = tpu.matmul %27, %8, %cst_20 {dimension_numbers = #tpu.dot_dimension_numbers<[1], [0], [0], [1], [0, 0, 1, 1], [], []>} : vector<64x32xf32>, vector<32x32xf32>, vector<64x32xf32> -> vector<64x32xf32>
    %29 = arith.mulf %12, %12 : vector<64x32xf32>
    %cst_21 = arith.constant 1.000000e+00 : f32
    %30 = vector.broadcast %cst_21 : f32 to vector<64x32xf32>
    %31 = arith.subf %30, %29 : vector<64x32xf32>
    %32 = arith.mulf %31, %28 : vector<64x32xf32>
    %cst_22 = arith.constant dense<0.000000e+00> : vector<64x16xf32>
    %33 = tpu.matmul %32, %7, %cst_22 {dimension_numbers = #tpu.dot_dimension_numbers<[1], [0], [0], [1], [0, 0, 1, 1], [], []>} : vector<64x32xf32>, vector<32x16xf32>, vector<64x16xf32> -> vector<64x16xf32>
    %cst_23 = arith.constant 0.000000e+00 : f32
    %34 = vector.broadcast %cst_23 : f32 to vector<64x16xf32>
    %35 = arith.subf %34, %33 : vector<64x16xf32>
    %c0_24 = arith.constant 0 : index
    %c0_25 = arith.constant 0 : index
    %36 = vector.load %arg10[%c0_24, %c0_25] : memref<64x1xf32, #tpu.memory_space<vmem>>, vector<64x1xf32>
    tpu.vector_store %arg10[%c0_24, %c0_25], %22 {strides = array<i32>} : memref<64x1xf32, #tpu.memory_space<vmem>>, vector<64x1xf32>,
    %c0_26 = arith.constant 0 : index
    %c0_27 = arith.constant 0 : index
    %37 = vector.load %arg11[%c0_26, %c0_27] : memref<64x16xf32, #tpu.memory_space<vmem>>, vector<64x16xf32>
    tpu.vector_store %arg11[%c0_26, %c0_27], %35 {strides = array<i32>} : memref<64x16xf32, #tpu.memory_space<vmem>>, vector<64x16xf32>,
    return
  }
  func.func @transform_0(%arg0: i32) -> (i32, i32) {
    %c0_i32 = arith.constant 0 : i32
    %c0_i32_0 = arith.constant 0 : i32
    return %arg0, %c0_i32 : i32, i32
  }
  func.func @transform_1(%arg0: i32) -> (i32, i32) {
    %c0_i32 = arith.constant 0 : i32
    %c0_i32_0 = arith.constant 0 : i32
    %c0_i32_1 = arith.constant 0 : i32
    return %c0_i32, %c0_i32_0 : i32, i32
  }
  func.func @transform_2(%arg0: i32) -> (i32, i32) {
    %c0_i32 = arith.constant 0 : i32
    %c0_i32_0 = arith.constant 0 : i32
    %c0_i32_1 = arith.constant 0 : i32
    return %c0_i32, %c0_i32_0 : i32, i32
  }
  func.func @transform_3(%arg0: i32) -> (i32, i32) {
    %c0_i32 = arith.constant 0 : i32
    %c0_i32_0 = arith.constant 0 : i32
    %c0_i32_1 = arith.constant 0 : i32
    return %c0_i32, %c0_i32_0 : i32, i32
  }
  func.func @transform_4(%arg0: i32) -> (i32, i32) {
    %c0_i32 = arith.constant 0 : i32
    %c0_i32_0 = arith.constant 0 : i32
    %c0_i32_1 = arith.constant 0 : i32
    return %c0_i32, %c0_i32_0 : i32, i32
  }
  func.func @transform_5(%arg0: i32) -> (i32, i32) {
    %c0_i32 = arith.constant 0 : i32
    %c0_i32_0 = arith.constant 0 : i32
    %c0_i32_1 = arith.constant 0 : i32
    return %c0_i32, %c0_i32_0 : i32, i32
  }
  func.func @transform_6(%arg0: i32) -> (i32, i32) {
    %c0_i32 = arith.constant 0 : i32
    %c0_i32_0 = arith.constant 0 : i32
    %c0_i32_1 = arith.constant 0 : i32
    return %c0_i32, %c0_i32_0 : i32, i32
  }
  func.func @transform_7(%arg0: i32) -> (i32, i32) {
    %c0_i32 = arith.constant 0 : i32
    %c0_i32_0 = arith.constant 0 : i32
    %c0_i32_1 = arith.constant 0 : i32
    return %c0_i32, %c0_i32_0 : i32, i32
  }
  func.func @transform_8(%arg0: i32) -> (i32, i32) {
    %c0_i32 = arith.constant 0 : i32
    %c0_i32_0 = arith.constant 0 : i32
    %c0_i32_1 = arith.constant 0 : i32
    return %c0_i32, %c0_i32_0 : i32, i32
  }
  func.func @transform_9(%arg0: i32) -> (i32, i32) {
    %c0_i32 = arith.constant 0 : i32
    %c0_i32_0 = arith.constant 0 : i32
    return %arg0, %c0_i32 : i32, i32
  }
  func.func @transform_10(%arg0: i32) -> (i32, i32) {
    %c0_i32 = arith.constant 0 : i32
    %c0_i32_0 = arith.constant 0 : i32
    return %arg0, %c0_i32 : i32, i32
  }
}

</mosaic_0001>

<llo_original>
// kernel: cgnet_forward.1
$region0: #{cgnet_forward.1}
  #allocation0 [shape = 'u32[]', space=smem, size = 0x4, offset = 0x4, fixed_abs, tag = 'smem constant byte address 0x4 - core index']
  #allocation1 [shape = 'u32[144,128]{1,0:T(1,128)}', space=vmem, size = 0x12000, scoped, tag = 'internal scratch']
  #allocation2 [shape = 'f32[1,1]{1,0:T(1,128)S(1)}', space=vmem, size = 0x200, scoped, tag = 'scoped memory for cgnet_forward.1']
  %s0 = inlined_call_operand.vmem [shape: f32[64,16], index: 0, kind: input, shape index: {}]
  %s1 = inlined_call_operand.vmem [shape: f32[16,32], index: 1, kind: input, shape index: {}]
  %s2 = inlined_call_operand.vmem [shape: f32[1,32], index: 2, kind: input, shape index: {}]
  %s3 = inlined_call_operand.vmem [shape: f32[32,32], index: 3, kind: input, shape index: {}]
  %s4 = inlined_call_operand.vmem [shape: f32[1,32], index: 4, kind: input, shape index: {}]
  %s5 = inlined_call_operand.vmem [shape: f32[1,32], index: 5, kind: input, shape index: {}]
  %s6 = inlined_call_operand.<no memory space> [shape: f32[1,1], index: 6, kind: input, shape index: {}]
  %s7 = inlined_call_operand.vmem [shape: f32[32,16], index: 7, kind: input, shape index: {}]
  %s8 = inlined_call_operand.vmem [shape: f32[32,32], index: 8, kind: input, shape index: {}]
  %s9 = inlined_call_operand.vmem [shape: f32[64,1], index: 9, kind: output, shape index: {0}]
  %s10 = inlined_call_operand.vmem [shape: f32[64,16], index: 10, kind: output, shape index: {1}]
  %11 = xla_tuple %s9, %s10
  %s12 = sld [smem:[#allocation0]]
  $region54: #{cgnet_forward.1} parent=0
    _
  %s14 = ssub.s32 1, %s12
  %s15 = scalar_select 0, %s14, %s12
  %v16 = vstv %s6
  %17 = vst [vmem:[#allocation2] sm:$0x1] %v16
  // Predicated region
  $region2: #{cgnet_forward.1} parent=0 // pred_check
    _
  $region3: #{cgnet_forward.1} parent=0 // pred_check_branch
    %19 = sbr.rel (0) target = $region5
  $region4: #{cgnet_forward.1} parent=0 // pred_region
    _
  $region5: #{cgnet_forward.1} parent=0 // pred_fallthru
    _
  // Predicated region
  $region6: #{cgnet_forward.1} parent=0 // pred_check
    _
  $region7: #{cgnet_forward.1} parent=0 // pred_check_branch
    %21 = sbr.rel (0) target = $region9
  $region8: #{cgnet_forward.1} parent=0 // pred_region
    _
  $region9: #{cgnet_forward.1} parent=0 // pred_fallthru
    _
  // Predicated region
  $region10: #{cgnet_forward.1} parent=0 // pred_check
    _
  $region11: #{cgnet_forward.1} parent=0 // pred_check_branch
    %23 = sbr.rel (0) target = $region13
  $region12: #{cgnet_forward.1} parent=0 // pred_region
    _
  $region13: #{cgnet_forward.1} parent=0 // pred_fallthru
    _
  // Predicated region
  $region14: #{cgnet_forward.1} parent=0 // pred_check
    _
  $region15: #{cgnet_forward.1} parent=0 // pred_check_branch
    %25 = sbr.rel (0) target = $region17
  $region16: #{cgnet_forward.1} parent=0 // pred_region
    _
  $region17: #{cgnet_forward.1} parent=0 // pred_fallthru
    _
  // Predicated region
  $region18: #{cgnet_forward.1} parent=0 // pred_check
    _
  $region19: #{cgnet_forward.1} parent=0 // pred_check_branch
    %27 = sbr.rel (0) target = $region21
  $region20: #{cgnet_forward.1} parent=0 // pred_region
    _
  $region21: #{cgnet_forward.1} parent=0 // pred_fallthru
    _
  // Predicated region
  $region22: #{cgnet_forward.1} parent=0 // pred_check
    _
  $region23: #{cgnet_forward.1} parent=0 // pred_check_branch
    %29 = sbr.rel (0) target = $region25
  $region24: #{cgnet_forward.1} parent=0 // pred_region
    _
  $region25: #{cgnet_forward.1} parent=0 // pred_fallthru
    _
  // Predicated region
  $region26: #{cgnet_forward.1} parent=0 // pred_check
    _
  $region27: #{cgnet_forward.1} parent=0 // pred_check_branch
    %31 = sbr.rel (0) target = $region29
  $region28: #{cgnet_forward.1} parent=0 // pred_region
    _
  $region29: #{cgnet_forward.1} parent=0 // pred_fallthru
    _
  // Predicated region
  $region30: #{cgnet_forward.1} parent=0 // pred_check
    _
  $region31: #{cgnet_forward.1} parent=0 // pred_check_branch
    %33 = sbr.rel (0) target = $region33
  $region32: #{cgnet_forward.1} parent=0 // pred_region
    _
  $region33: #{cgnet_forward.1} parent=0 // pred_fallthru
    _
  // Predicated region
  $region34: #{cgnet_forward.1} parent=0 // pred_check
    _
  $region35: #{cgnet_forward.1} parent=0 // pred_check_branch
    %35 = sbr.rel (0) target = $region37
  $region36: #{cgnet_forward.1} parent=0 // pred_region
    _
  $region37: #{cgnet_forward.1} parent=0 // pred_fallthru
    _
  %v36 = vld [vmem:[%s0] sm:$0xff]
  %v37 = vld [vmem:[%s0 + $0x8] sm:$0xff]
  %v38 = vld [vmem:[%s0 + $0x10] sm:$0xff]
  %v39 = vld [vmem:[%s0 + $0x18] sm:$0xff]
  %v40 = vld [vmem:[%s0 + $0x20] sm:$0xff]
  %v41 = vld [vmem:[%s0 + $0x28] sm:$0xff]
  %v42 = vld [vmem:[%s0 + $0x30] sm:$0xff]
  %v43 = vld [vmem:[%s0 + $0x38] sm:$0xff]
  %v44 = vld [vmem:[%s1] sm:$0xff]
  %v45 = vld [vmem:[%s1 + $0x8] sm:$0xff]
  %v46 = vld [vmem:[%s2] sm:$0x1]
  %v47 = vld [vmem:[%s3] sm:$0xff]
  %v48 = vld [vmem:[%s3 + $0x8] sm:$0xff]
  %v49 = vld [vmem:[%s3 + $0x10] sm:$0xff]
  %v50 = vld [vmem:[%s3 + $0x18] sm:$0xff]
  %v51 = vld [vmem:[%s4] sm:$0x1]
  %v52 = vld [vmem:[%s5] sm:$0x1]
  %v53 = vld [vmem:[#allocation2] sm:$0x1]
  %v54 = vld [vmem:[%s7] sm:$0xff]
  %v55 = vld [vmem:[%s7 + $0x8] sm:$0xff]
  %v56 = vld [vmem:[%s7 + $0x10] sm:$0xff]
  %v57 = vld [vmem:[%s7 + $0x18] sm:$0xff]
  %v58 = vld [vmem:[%s8] sm:$0xff]
  %v59 = vld [vmem:[%s8 + $0x8] sm:$0xff]
  %v60 = vld [vmem:[%s8 + $0x10] sm:$0xff]
  %v61 = vld [vmem:[%s8 + $0x18] sm:$0xff]
  %v63 = vlaneseq
  %v64 = vshrl.u32 %v63, 7
  %v65 = vsub.s32 0, %v64
  %v66 = vrot.slane %v46, %v65
  %vm68 = vcmask 130048
  %v70 = vsel %vm68, %v36, 0
  %v73 = vsel %vm68, %v37, 0
  %v76 = vsel %vm68, %v38, 0
  %v79 = vsel %vm68, %v39, 0
  %v82 = vsel %vm68, %v40, 0
  %v85 = vsel %vm68, %v41, 0
  %v88 = vsel %vm68, %v42, 0
  %v91 = vsel %vm68, %v43, 0
  %93 = vmatprep.subr.mxu0 0.0
  %94 = vmatpush1.msra.mxu0 0.0
  %95 = vmatprep.subr.mxu0 0.0
  %96 = vmatpush1.msra.mxu0 0.0
  %97 = vmatprep.subr.mxu0 0.0
  %98 = vmatpush1.msra.mxu0 0.0
  %99 = vmatprep.subr.mxu0 0.0
  %100 = vmatpush1.msra.mxu0 0.0
  %101 = vmatprep.subr.mxu0 0.0
  %102 = vmatpush1.msra.mxu0 0.0
  %103 = vmatprep.subr.mxu0 0.0
  %104 = vmatpush1.msra.mxu0 0.0
  %105 = vmatprep.subr.mxu0 0.0
  %106 = vmatpush1.msra.mxu0 0.0
  %107 = vmatprep.subr.mxu0 0.0
  %108 = vmatpush1.msra.mxu0 0.0
  %109 = vmatprep.subr.mxu0 0.0
  %110 = vmatpush1.msra.mxu0 0.0
  %111 = vmatprep.subr.mxu0 0.0
  %112 = vmatpush1.msra.mxu0 0.0
  %113 = vmatprep.subr.mxu0 0.0
  %114 = vmatpush1.msra.mxu0 0.0
  %115 = vmatprep.subr.mxu0 0.0
  %116 = vmatpush1.msra.mxu0 0.0
  %117 = vmatprep.subr.mxu0 0.0
  %118 = vmatpush1.msra.mxu0 0.0
  %119 = vmatprep.subr.mxu0 0.0
  %120 = vmatpush1.msra.mxu0 0.0
  %121 = vmatprep.subr.mxu0 0.0
  %122 = vmatpush1.msra.mxu0 %v45
  %123 = vmatprep.subr.mxu0 0.0
  %124 = vmatpush1.msra.mxu0 %v44
  %125 = vmatprep.subr.mxu0 0.0
  %126 = vmatpush2.msra.mxu0 0.0
  %127 = vmatprep.subr.mxu0 0.0
  %128 = vmatpush2.msra.mxu0 0.0
  %129 = vmatprep.subr.mxu0 0.0
  %130 = vmatpush2.msra.mxu0 0.0
  %131 = vmatprep.subr.mxu0 0.0
  %132 = vmatpush2.msra.mxu0 0.0
  %133 = vmatprep.subr.mxu0 0.0
  %134 = vmatpush2.msra.mxu0 0.0
  %135 = vmatprep.subr.mxu0 0.0
  %136 = vmatpush2.msra.mxu0 0.0
  %137 = vmatprep.subr.mxu0 0.0
  %138 = vmatpush2.msra.mxu0 0.0
  %139 = vmatprep.subr.mxu0 0.0
  %140 = vmatpush2.msra.mxu0 0.0
  %141 = vmatprep.subr.mxu0 0.0
  %142 = vmatpush2.msra.mxu0 0.0
  %143 = vmatprep.subr.mxu0 0.0
  %144 = vmatpush2.msra.mxu0 0.0
  %145 = vmatprep.subr.mxu0 0.0
  %146 = vmatpush2.msra.mxu0 0.0
  %147 = vmatprep.subr.mxu0 0.0
  %148 = vmatpush2.msra.mxu0 0.0
  %149 = vmatprep.subr.mxu0 0.0
  %150 = vmatpush2.msra.mxu0 0.0
  %151 = vmatprep.subr.mxu0 0.0
  %152 = vmatpush2.msra.mxu0 0.0
  %153 = vmatprep.subr.mxu0 0.0
  %154 = vmatpush2.msra.mxu0 0.0
  %155 = vmatprep.subr.mxu0 0.0
  %156 = vmatpush2.msra.mxu0 0.0
  %157 = vmatprep.mubr.f32.mxu0 0.0
  %158 = vmatmul.mubr.f32.gmra.mxu0 %v70
  %v159 = vpop.f32.mrf.mxu0
  %v160 = vadd.f32 %v66, %v159
  %v161 = vpop.f32.mrf.mxu0
  %162 = vmatprep.mubr.f32.mxu0 0.0
  %163 = vmatmul.mubr.f32.gmra.mxu0 %v73
  %v164 = vpop.f32.mrf.mxu0
  %v165 = vadd.f32 %v66, %v164
  %v166 = vpop.f32.mrf.mxu0
  %167 = vmatprep.mubr.f32.mxu0 0.0
  %168 = vmatmul.mubr.f32.gmra.mxu0 %v76
  %v169 = vpop.f32.mrf.mxu0
  %v170 = vadd.f32 %v66, %v169
  %v171 = vpop.f32.mrf.mxu0
  %172 = vmatprep.mubr.f32.mxu0 0.0
  %173 = vmatmul.mubr.f32.gmra.mxu0 %v79
  %v174 = vpop.f32.mrf.mxu0
  %v175 = vadd.f32 %v66, %v174
  %v176 = vpop.f32.mrf.mxu0
  %177 = vmatprep.mubr.f32.mxu0 0.0
  %178 = vmatmul.mubr.f32.gmra.mxu0 %v82
  %v179 = vpop.f32.mrf.mxu0
  %v180 = vadd.f32 %v66, %v179
  %v181 = vpop.f32.mrf.mxu0
  %182 = vmatprep.mubr.f32.mxu0 0.0
  %183 = vmatmul.mubr.f32.gmra.mxu0 %v85
  %v184 = vpop.f32.mrf.mxu0
  %v185 = vadd.f32 %v66, %v184
  %v186 = vpop.f32.mrf.mxu0
  %187 = vmatprep.mubr.f32.mxu0 0.0
  %188 = vmatmul.mubr.f32.gmra.mxu0 %v88
  %v189 = vpop.f32.mrf.mxu0
  %v190 = vadd.f32 %v66, %v189
  %v191 = vpop.f32.mrf.mxu0
  %192 = vmatprep.mubr.f32.mxu0 0.0
  %193 = vmatmul.mubr.f32.gmra.mxu0 %v91
  %v194 = vpop.f32.mrf.mxu0
  %v195 = vadd.f32 %v66, %v194
  %v196 = vpop.f32.mrf.mxu0
  %197 = vdwg.mxu0
  %v198 = vtanh.pop %v160
  %v199 = vtanh.pop %v165
  %v200 = vtanh.pop %v170
  %v201 = vtanh.pop %v175
  %v202 = vtanh.pop %v180
  %v203 = vtanh.pop %v185
  %v204 = vtanh.pop %v190
  %v205 = vtanh.pop %v195
  %v207 = vlaneseq
  %v208 = vshrl.u32 %v207, 7
  %v209 = vsub.s32 0, %v208
  %v210 = vrot.slane %v51, %v209
  %vm212 = vcmask 261120
  %v214 = vsel %vm212, %v198, 0
  %v217 = vsel %vm212, %v199, 0
  %v220 = vsel %vm212, %v200, 0
  %v223 = vsel %vm212, %v201, 0
  %v226 = vsel %vm212, %v202, 0
  %v229 = vsel %vm212, %v203, 0
  %v232 = vsel %vm212, %v204, 0
  %v235 = vsel %vm212, %v205, 0
  %237 = vmatprep.subr.mxu0 0.0
  %238 = vmatpush1.msra.mxu0 0.0
  %239 = vmatprep.subr.mxu0 0.0
  %240 = vmatpush1.msra.mxu0 0.0
  %241 = vmatprep.subr.mxu0 0.0
  %242 = vmatpush1.msra.mxu0 0.0
  %243 = vmatprep.subr.mxu0 0.0
  %244 = vmatpush1.msra.mxu0 0.0
  %245 = vmatprep.subr.mxu0 0.0
  %246 = vmatpush1.msra.mxu0 0.0
  %247 = vmatprep.subr.mxu0 0.0
  %248 = vmatpush1.msra.mxu0 0.0
  %249 = vmatprep.subr.mxu0 0.0
  %250 = vmatpush1.msra.mxu0 0.0
  %251 = vmatprep.subr.mxu0 0.0
  %252 = vmatpush1.msra.mxu0 0.0
  %253 = vmatprep.subr.mxu0 0.0
  %254 = vmatpush1.msra.mxu0 0.0
  %255 = vmatprep.subr.mxu0 0.0
  %256 = vmatpush1.msra.mxu0 0.0
  %257 = vmatprep.subr.mxu0 0.0
  %258 = vmatpush1.msra.mxu0 0.0
  %259 = vmatprep.subr.mxu0 0.0
  %260 = vmatpush1.msra.mxu0 0.0
  %261 = vmatprep.subr.mxu0 0.0
  %262 = vmatpush1.msra.mxu0 %v50
  %263 = vmatprep.subr.mxu0 0.0
  %264 = vmatpush1.msra.mxu0 %v49
  %265 = vmatprep.subr.mxu0 0.0
  %266 = vmatpush1.msra.mxu0 %v48
  %267 = vmatprep.subr.mxu0 0.0
  %268 = vmatpush1.msra.mxu0 %v47
  %269 = vmatprep.subr.mxu0 0.0
  %270 = vmatpush2.msra.mxu0 0.0
  %271 = vmatprep.subr.mxu0 0.0
  %272 = vmatpush2.msra.mxu0 0.0
  %273 = vmatprep.subr.mxu0 0.0
  %274 = vmatpush2.msra.mxu0 0.0
  %275 = vmatprep.subr.mxu0 0.0
  %276 = vmatpush2.msra.mxu0 0.0
  %277 = vmatprep.subr.mxu0 0.0
  %278 = vmatpush2.msra.mxu0 0.0
  %279 = vmatprep.subr.mxu0 0.0
  %280 = vmatpush2.msra.mxu0 0.0
  %281 = vmatprep.subr.mxu0 0.0
  %282 = vmatpush2.msra.mxu0 0.0
  %283 = vmatprep.subr.mxu0 0.0
  %284 = vmatpush2.msra.mxu0 0.0
  %285 = vmatprep.subr.mxu0 0.0
  %286 = vmatpush2.msra.mxu0 0.0
  %287 = vmatprep.subr.mxu0 0.0
  %288 = vmatpush2.msra.mxu0 0.0
  %289 = vmatprep.subr.mxu0 0.0
  %290 = vmatpush2.msra.mxu0 0.0
  %291 = vmatprep.subr.mxu0 0.0
  %292 = vmatpush2.msra.mxu0 0.0
  %293 = vmatprep.subr.mxu0 0.0
  %294 = vmatpush2.msra.mxu0 0.0
  %295 = vmatprep.subr.mxu0 0.0
  %296 = vmatpush2.msra.mxu0 0.0
  %297 = vmatprep.subr.mxu0 0.0
  %298 = vmatpush2.msra.mxu0 0.0
  %299 = vmatprep.subr.mxu0 0.0
  %300 = vmatpush2.msra.mxu0 0.0
  %301 = vmatprep.mubr.f32.mxu0 0.0
  %302 = vmatmul.mubr.f32.gmra.mxu0 %v214
  %v303 = vpop.f32.mrf.mxu0
  %v304 = vadd.f32 %v210, %v303
  %v305 = vpop.f32.mrf.mxu0
  %306 = vmatprep.mubr.f32.mxu0 0.0
  %307 = vmatmul.mubr.f32.gmra.mxu0 %v217
  %v308 = vpop.f32.mrf.mxu0
  %v309 = vadd.f32 %v210, %v308
  %v310 = vpop.f32.mrf.mxu0
  %311 = vmatprep.mubr.f32.mxu0 0.0
  %312 = vmatmul.mubr.f32.gmra.mxu0 %v220
  %v313 = vpop.f32.mrf.mxu0
  %v314 = vadd.f32 %v210, %v313
  %v315 = vpop.f32.mrf.mxu0
  %316 = vmatprep.mubr.f32.mxu0 0.0
  %317 = vmatmul.mubr.f32.gmra.mxu0 %v223
  %v318 = vpop.f32.mrf.mxu0
  %v319 = vadd.f32 %v210, %v318
  %v320 = vpop.f32.mrf.mxu0
  %321 = vmatprep.mubr.f32.mxu0 0.0
  %322 = vmatmul.mubr.f32.gmra.mxu0 %v226
  %v323 = vpop.f32.mrf.mxu0
  %v324 = vadd.f32 %v210, %v323
  %v325 = vpop.f32.mrf.mxu0
  %326 = vmatprep.mubr.f32.mxu0 0.0
  %327 = vmatmul.mubr.f32.gmra.mxu0 %v229
  %v328 = vpop.f32.mrf.mxu0
  %v329 = vadd.f32 %v210, %v328
  %v330 = vpop.f32.mrf.mxu0
  %331 = vmatprep.mubr.f32.mxu0 0.0
  %332 = vmatmul.mubr.f32.gmra.mxu0 %v232
  %v333 = vpop.f32.mrf.mxu0
  %v334 = vadd.f32 %v210, %v333
  %v335 = vpop.f32.mrf.mxu0
  %336 = vmatprep.mubr.f32.mxu0 0.0
  %337 = vmatmul.mubr.f32.gmra.mxu0 %v235
  %v338 = vpop.f32.mrf.mxu0
  %v339 = vadd.f32 %v210, %v338
  %v340 = vpop.f32.mrf.mxu0
  %341 = vdwg.mxu0
  %v342 = vtanh.pop %v304
  %v343 = vtanh.pop %v309
  %v344 = vtanh.pop %v314
  %v345 = vtanh.pop %v319
  %v346 = vtanh.pop %v324
  %v347 = vtanh.pop %v329
  %v348 = vtanh.pop %v334
  %v349 = vtanh.pop %v339
  %v351 = vlaneseq
  %v352 = vshrl.u32 %v351, 7
  %v353 = vsub.s32 0, %v352
  %v354 = vrot.slane %v52, %v353
  %v356 = vmul.f32 %v342, %v354
  %v357 = vmul.f32 %v343, %v354
  %v358 = vmul.f32 %v344, %v354
  %v359 = vmul.f32 %v345, %v354
  %v360 = vmul.f32 %v346, %v354
  %v361 = vmul.f32 %v347, %v354
  %v362 = vmul.f32 %v348, %v354
  %v363 = vmul.f32 %v349, %v354
  %v364 = vsel %vm212, %v356, 0.0
  %365 = vadd.xlane.f32.xlu0 %v364
  %v366 = vpop.xlane.xlu0 %365
  %v367 = vsel %vm212, %v357, 0.0
  %368 = vadd.xlane.f32.xlu0 %v367
  %v369 = vpop.xlane.xlu0 %368
  %v370 = vsel %vm212, %v358, 0.0
  %371 = vadd.xlane.f32.xlu0 %v370
  %v372 = vpop.xlane.xlu0 %371
  %v373 = vsel %vm212, %v359, 0.0
  %374 = vadd.xlane.f32.xlu0 %v373
  %v375 = vpop.xlane.xlu0 %374
  %v376 = vsel %vm212, %v360, 0.0
  %377 = vadd.xlane.f32.xlu0 %v376
  %v378 = vpop.xlane.xlu0 %377
  %v379 = vsel %vm212, %v361, 0.0
  %380 = vadd.xlane.f32.xlu0 %v379
  %v381 = vpop.xlane.xlu0 %380
  %v382 = vsel %vm212, %v362, 0.0
  %383 = vadd.xlane.f32.xlu0 %v382
  %v384 = vpop.xlane.xlu0 %383
  %v385 = vsel %vm212, %v363, 0.0
  %386 = vadd.xlane.f32.xlu0 %v385
  %v387 = vpop.xlane.xlu0 %386
  %v389 = vlaneseq
  %v390 = vshrl.u32 %v389, 7
  %v391 = vsub.s32 0, %v390
  %v392 = vrot.slane %v53, %v391
  %v394 = vadd.f32 %v366, %v392
  %v395 = vadd.f32 %v369, %v392
  %v396 = vadd.f32 %v372, %v392
  %v397 = vadd.f32 %v375, %v392
  %v398 = vadd.f32 %v378, %v392
  %v399 = vadd.f32 %v381, %v392
  %v400 = vadd.f32 %v384, %v392
  %v401 = vadd.f32 %v387, %v392
  %v402 = vmul.f32 %v342, %v342
  %v403 = vmul.f32 %v343, %v343
  %v404 = vmul.f32 %v344, %v344
  %v405 = vmul.f32 %v345, %v345
  %v406 = vmul.f32 %v346, %v346
  %v407 = vmul.f32 %v347, %v347
  %v408 = vmul.f32 %v348, %v348
  %v409 = vmul.f32 %v349, %v349
  %v410 = vsub.f32 1.0, %v402
  %v411 = vsub.f32 1.0, %v403
  %v412 = vsub.f32 1.0, %v404
  %v413 = vsub.f32 1.0, %v405
  %v414 = vsub.f32 1.0, %v406
  %v415 = vsub.f32 1.0, %v407
  %v416 = vsub.f32 1.0, %v408
  %v417 = vsub.f32 1.0, %v409
  %v418 = vmul.f32 %v410, %v354
  %v419 = vmul.f32 %v411, %v354
  %v420 = vmul.f32 %v412, %v354
  %v421 = vmul.f32 %v413, %v354
  %v422 = vmul.f32 %v414, %v354
  %v423 = vmul.f32 %v415, %v354
  %v424 = vmul.f32 %v416, %v354
  %v425 = vmul.f32 %v417, %v354
  %v427 = vsel %vm212, %v418, 0
  %v430 = vsel %vm212, %v419, 0
  %v433 = vsel %vm212, %v420, 0
  %v436 = vsel %vm212, %v421, 0
  %v439 = vsel %vm212, %v422, 0
  %v442 = vsel %vm212, %v423, 0
  %v445 = vsel %vm212, %v424, 0
  %v448 = vsel %vm212, %v425, 0
  %450 = vmatprep.subr.mxu0 0.0
  %451 = vmatpush1.msra.mxu0 0.0
  %452 = vmatprep.subr.mxu0 0.0
  %453 = vmatpush1.msra.mxu0 0.0
  %454 = vmatprep.subr.mxu0 0.0
  %455 = vmatpush1.msra.mxu0 0.0
  %456 = vmatprep.subr.mxu0 0.0
  %457 = vmatpush1.msra.mxu0 0.0
  %458 = vmatprep.subr.mxu0 0.0
  %459 = vmatpush1.msra.mxu0 0.0
  %460 = vmatprep.subr.mxu0 0.0
  %461 = vmatpush1.msra.mxu0 0.0
  %462 = vmatprep.subr.mxu0 0.0
  %463 = vmatpush1.msra.mxu0 0.0
  %464 = vmatprep.subr.mxu0 0.0
  %465 = vmatpush1.msra.mxu0 0.0
  %466 = vmatprep.subr.mxu0 0.0
  %467 = vmatpush1.msra.mxu0 0.0
  %468 = vmatprep.subr.mxu0 0.0
  %469 = vmatpush1.msra.mxu0 0.0
  %470 = vmatprep.subr.mxu0 0.0
  %471 = vmatpush1.msra.mxu0 0.0
  %472 = vmatprep.subr.mxu0 0.0
  %473 = vmatpush1.msra.mxu0 0.0
  %474 = vmatprep.subr.mxu0 0.0
  %475 = vmatpush1.msra.mxu0 %v61
  %476 = vmatprep.subr.mxu0 0.0
  %477 = vmatpush1.msra.mxu0 %v60
  %478 = vmatprep.subr.mxu0 0.0
  %479 = vmatpush1.msra.mxu0 %v59
  %480 = vmatprep.subr.mxu0 0.0
  %481 = vmatpush1.msra.mxu0 %v58
  %482 = vmatprep.subr.mxu0 0.0
  %483 = vmatpush2.msra.mxu0 0.0
  %484 = vmatprep.subr.mxu0 0.0
  %485 = vmatpush2.msra.mxu0 0.0
  %486 = vmatprep.subr.mxu0 0.0
  %487 = vmatpush2.msra.mxu0 0.0
  %488 = vmatprep.subr.mxu0 0.0
  %489 = vmatpush2.msra.mxu0 0.0
  %490 = vmatprep.subr.mxu0 0.0
  %491 = vmatpush2.msra.mxu0 0.0
  %492 = vmatprep.subr.mxu0 0.0
  %493 = vmatpush2.msra.mxu0 0.0
  %494 = vmatprep.subr.mxu0 0.0
  %495 = vmatpush2.msra.mxu0 0.0
  %496 = vmatprep.subr.mxu0 0.0
  %497 = vmatpush2.msra.mxu0 0.0
  %498 = vmatprep.subr.mxu0 0.0
  %499 = vmatpush2.msra.mxu0 0.0
  %500 = vmatprep.subr.mxu0 0.0
  %501 = vmatpush2.msra.mxu0 0.0
  %502 = vmatprep.subr.mxu0 0.0
  %503 = vmatpush2.msra.mxu0 0.0
  %504 = vmatprep.subr.mxu0 0.0
  %505 = vmatpush2.msra.mxu0 0.0
  %506 = vmatprep.subr.mxu0 0.0
  %507 = vmatpush2.msra.mxu0 0.0
  %508 = vmatprep.subr.mxu0 0.0
  %509 = vmatpush2.msra.mxu0 0.0
  %510 = vmatprep.subr.mxu0 0.0
  %511 = vmatpush2.msra.mxu0 0.0
  %512 = vmatprep.subr.mxu0 0.0
  %513 = vmatpush2.msra.mxu0 0.0
  %514 = vmatprep.mubr.f32.mxu0 0.0
  %515 = vmatmul.mubr.f32.gmra.mxu0 %v427
  %v516 = vpop.f32.mrf.mxu0
  %v517 = vadd.f32 0.0, %v516
  %v518 = vpop.f32.mrf.mxu0
  %519 = vmatprep.mubr.f32.mxu0 0.0
  %520 = vmatmul.mubr.f32.gmra.mxu0 %v430
  %v521 = vpop.f32.mrf.mxu0
  %v522 = vadd.f32 0.0, %v521
  %v523 = vpop.f32.mrf.mxu0
  %524 = vmatprep.mubr.f32.mxu0 0.0
  %525 = vmatmul.mubr.f32.gmra.mxu0 %v433
  %v526 = vpop.f32.mrf.mxu0
  %v527 = vadd.f32 0.0, %v526
  %v528 = vpop.f32.mrf.mxu0
  %529 = vmatprep.mubr.f32.mxu0 0.0
  %530 = vmatmul.mubr.f32.gmra.mxu0 %v436
  %v531 = vpop.f32.mrf.mxu0
  %v532 = vadd.f32 0.0, %v531
  %v533 = vpop.f32.mrf.mxu0
  %534 = vmatprep.mubr.f32.mxu0 0.0
  %535 = vmatmul.mubr.f32.gmra.mxu0 %v439
  %v536 = vpop.f32.mrf.mxu0
  %v537 = vadd.f32 0.0, %v536
  %v538 = vpop.f32.mrf.mxu0
  %539 = vmatprep.mubr.f32.mxu0 0.0
  %540 = vmatmul.mubr.f32.gmra.mxu0 %v442
  %v541 = vpop.f32.mrf.mxu0
  %v542 = vadd.f32 0.0, %v541
  %v543 = vpop.f32.mrf.mxu0
  %544 = vmatprep.mubr.f32.mxu0 0.0
  %545 = vmatmul.mubr.f32.gmra.mxu0 %v445
  %v546 = vpop.f32.mrf.mxu0
  %v547 = vadd.f32 0.0, %v546
  %v548 = vpop.f32.mrf.mxu0
  %549 = vmatprep.mubr.f32.mxu0 0.0
  %550 = vmatmul.mubr.f32.gmra.mxu0 %v448
  %v551 = vpop.f32.mrf.mxu0
  %v552 = vadd.f32 0.0, %v551
  %v553 = vpop.f32.mrf.mxu0
  %554 = vdwg.mxu0
  %v555 = vmul.f32 %v198, %v198
  %v556 = vmul.f32 %v199, %v199
  %v557 = vmul.f32 %v200, %v200
  %v558 = vmul.f32 %v201, %v201
  %v559 = vmul.f32 %v202, %v202
  %v560 = vmul.f32 %v203, %v203
  %v561 = vmul.f32 %v204, %v204
  %v562 = vmul.f32 %v205, %v205
  %v563 = vsub.f32 1.0, %v555
  %v564 = vsub.f32 1.0, %v556
  %v565 = vsub.f32 1.0, %v557
  %v566 = vsub.f32 1.0, %v558
  %v567 = vsub.f32 1.0, %v559
  %v568 = vsub.f32 1.0, %v560
  %v569 = vsub.f32 1.0, %v561
  %v570 = vsub.f32 1.0, %v562
  %v571 = vmul.f32 %v563, %v517
  %v572 = vmul.f32 %v564, %v522
  %v573 = vmul.f32 %v565, %v527
  %v574 = vmul.f32 %v566, %v532
  %v575 = vmul.f32 %v567, %v537
  %v576 = vmul.f32 %v568, %v542
  %v577 = vmul.f32 %v569, %v547
  %v578 = vmul.f32 %v570, %v552
  %v580 = vsel %vm212, %v571, 0
  %v583 = vsel %vm212, %v572, 0
  %v586 = vsel %vm212, %v573, 0
  %v589 = vsel %vm212, %v574, 0
  %v592 = vsel %vm212, %v575, 0
  %v595 = vsel %vm212, %v576, 0
  %v598 = vsel %vm212, %v577, 0
  %v601 = vsel %vm212, %v578, 0
  %603 = vmatprep.subr.mxu0 0.0
  %604 = vmatpush1.msra.mxu0 0.0
  %605 = vmatprep.subr.mxu0 0.0
  %606 = vmatpush1.msra.mxu0 0.0
  %607 = vmatprep.subr.mxu0 0.0
  %608 = vmatpush1.msra.mxu0 0.0
  %609 = vmatprep.subr.mxu0 0.0
  %610 = vmatpush1.msra.mxu0 0.0
  %611 = vmatprep.subr.mxu0 0.0
  %612 = vmatpush1.msra.mxu0 0.0
  %613 = vmatprep.subr.mxu0 0.0
  %614 = vmatpush1.msra.mxu0 0.0
  %615 = vmatprep.subr.mxu0 0.0
  %616 = vmatpush1.msra.mxu0 0.0
  %617 = vmatprep.subr.mxu0 0.0
  %618 = vmatpush1.msra.mxu0 0.0
  %619 = vmatprep.subr.mxu0 0.0
  %620 = vmatpush1.msra.mxu0 0.0
  %621 = vmatprep.subr.mxu0 0.0
  %622 = vmatpush1.msra.mxu0 0.0
  %623 = vmatprep.subr.mxu0 0.0
  %624 = vmatpush1.msra.mxu0 0.0
  %625 = vmatprep.subr.mxu0 0.0
  %626 = vmatpush1.msra.mxu0 0.0
  %627 = vmatprep.subr.mxu0 0.0
  %628 = vmatpush1.msra.mxu0 %v57
  %629 = vmatprep.subr.mxu0 0.0
  %630 = vmatpush1.msra.mxu0 %v56
  %631 = vmatprep.subr.mxu0 0.0
  %632 = vmatpush1.msra.mxu0 %v55
  %633 = vmatprep.subr.mxu0 0.0
  %634 = vmatpush1.msra.mxu0 %v54
  %635 = vmatprep.subr.mxu0 0.0
  %636 = vmatpush2.msra.mxu0 0.0
  %637 = vmatprep.subr.mxu0 0.0
  %638 = vmatpush2.msra.mxu0 0.0
  %639 = vmatprep.subr.mxu0 0.0
  %640 = vmatpush2.msra.mxu0 0.0
  %641 = vmatprep.subr.mxu0 0.0
  %642 = vmatpush2.msra.mxu0 0.0
  %643 = vmatprep.subr.mxu0 0.0
  %644 = vmatpush2.msra.mxu0 0.0
  %645 = vmatprep.subr.mxu0 0.0
  %646 = vmatpush2.msra.mxu0 0.0
  %647 = vmatprep.subr.mxu0 0.0
  %648 = vmatpush2.msra.mxu0 0.0
  %649 = vmatprep.subr.mxu0 0.0
  %650 = vmatpush2.msra.mxu0 0.0
  %651 = vmatprep.subr.mxu0 0.0
  %652 = vmatpush2.msra.mxu0 0.0
  %653 = vmatprep.subr.mxu0 0.0
  %654 = vmatpush2.msra.mxu0 0.0
  %655 = vmatprep.subr.mxu0 0.0
  %656 = vmatpush2.msra.mxu0 0.0
  %657 = vmatprep.subr.mxu0 0.0
  %658 = vmatpush2.msra.mxu0 0.0
  %659 = vmatprep.subr.mxu0 0.0
  %660 = vmatpush2.msra.mxu0 0.0
  %661 = vmatprep.subr.mxu0 0.0
  %662 = vmatpush2.msra.mxu0 0.0
  %663 = vmatprep.subr.mxu0 0.0
  %664 = vmatpush2.msra.mxu0 0.0
  %665 = vmatprep.subr.mxu0 0.0
  %666 = vmatpush2.msra.mxu0 0.0
  %667 = vmatprep.mubr.f32.mxu0 0.0
  %668 = vmatmul.mubr.f32.gmra.mxu0 %v580
  %v669 = vpop.f32.mrf.mxu0
  %v670 = vadd.f32 0.0, %v669
  %v671 = vpop.f32.mrf.mxu0
  %672 = vmatprep.mubr.f32.mxu0 0.0
  %673 = vmatmul.mubr.f32.gmra.mxu0 %v583
  %v674 = vpop.f32.mrf.mxu0
  %v675 = vadd.f32 0.0, %v674
  %v676 = vpop.f32.mrf.mxu0
  %677 = vmatprep.mubr.f32.mxu0 0.0
  %678 = vmatmul.mubr.f32.gmra.mxu0 %v586
  %v679 = vpop.f32.mrf.mxu0
  %v680 = vadd.f32 0.0, %v679
  %v681 = vpop.f32.mrf.mxu0
  %682 = vmatprep.mubr.f32.mxu0 0.0
  %683 = vmatmul.mubr.f32.gmra.mxu0 %v589
  %v684 = vpop.f32.mrf.mxu0
  %v685 = vadd.f32 0.0, %v684
  %v686 = vpop.f32.mrf.mxu0
  %687 = vmatprep.mubr.f32.mxu0 0.0
  %688 = vmatmul.mubr.f32.gmra.mxu0 %v592
  %v689 = vpop.f32.mrf.mxu0
  %v690 = vadd.f32 0.0, %v689
  %v691 = vpop.f32.mrf.mxu0
  %692 = vmatprep.mubr.f32.mxu0 0.0
  %693 = vmatmul.mubr.f32.gmra.mxu0 %v595
  %v694 = vpop.f32.mrf.mxu0
  %v695 = vadd.f32 0.0, %v694
  %v696 = vpop.f32.mrf.mxu0
  %697 = vmatprep.mubr.f32.mxu0 0.0
  %698 = vmatmul.mubr.f32.gmra.mxu0 %v598
  %v699 = vpop.f32.mrf.mxu0
  %v700 = vadd.f32 0.0, %v699
  %v701 = vpop.f32.mrf.mxu0
  %702 = vmatprep.mubr.f32.mxu0 0.0
  %703 = vmatmul.mubr.f32.gmra.mxu0 %v601
  %v704 = vpop.f32.mrf.mxu0
  %v705 = vadd.f32 0.0, %v704
  %v706 = vpop.f32.mrf.mxu0
  %707 = vdwg.mxu0
  %v708 = vsub.f32 0.0, %v670
  %v709 = vsub.f32 0.0, %v675
  %v710 = vsub.f32 0.0, %v680
  %v711 = vsub.f32 0.0, %v685
  %v712 = vsub.f32 0.0, %v690
  %v713 = vsub.f32 0.0, %v695
  %v714 = vsub.f32 0.0, %v700
  %v715 = vsub.f32 0.0, %v705
  %vm716 = vcmask 7168
  %717 = vst.msk [vmem:[%s9] sm:$0xff] %vm716, %v394
  %718 = vst.msk [vmem:[%s9 + $0x8] sm:$0xff] %vm716, %v395
  %719 = vst.msk [vmem:[%s9 + $0x10] sm:$0xff] %vm716, %v396
  %720 = vst.msk [vmem:[%s9 + $0x18] sm:$0xff] %vm716, %v397
  %721 = vst.msk [vmem:[%s9 + $0x20] sm:$0xff] %vm716, %v398
  %722 = vst.msk [vmem:[%s9 + $0x28] sm:$0xff] %vm716, %v399
  %723 = vst.msk [vmem:[%s9 + $0x30] sm:$0xff] %vm716, %v400
  %724 = vst.msk [vmem:[%s9 + $0x38] sm:$0xff] %vm716, %v401
  %725 = vst.msk [vmem:[%s10] sm:$0xff] %vm68, %v708
  %726 = vst.msk [vmem:[%s10 + $0x8] sm:$0xff] %vm68, %v709
  %727 = vst.msk [vmem:[%s10 + $0x10] sm:$0xff] %vm68, %v710
  %728 = vst.msk [vmem:[%s10 + $0x18] sm:$0xff] %vm68, %v711
  %729 = vst.msk [vmem:[%s10 + $0x20] sm:$0xff] %vm68, %v712
  %730 = vst.msk [vmem:[%s10 + $0x28] sm:$0xff] %vm68, %v713
  %731 = vst.msk [vmem:[%s10 + $0x30] sm:$0xff] %vm68, %v714
  %732 = vst.msk [vmem:[%s10 + $0x38] sm:$0xff] %vm68, %v715
  // Predicated region
  $region38: #{cgnet_forward.1} parent=0 // pred_check
    _
  $region39: #{cgnet_forward.1} parent=0 // pred_check_branch
    %734 = sbr.rel (0) target = $region41
  $region40: #{cgnet_forward.1} parent=0 // pred_region
    _
  $region41: #{cgnet_forward.1} parent=0 // pred_fallthru
    _
  // Predicated region
  $region42: #{cgnet_forward.1} parent=0 // pred_check
    _
  $region43: #{cgnet_forward.1} parent=0 // pred_check_branch
    %736 = sbr.rel (0) target = $region45
  $region44: #{cgnet_forward.1} parent=0 // pred_region
    _
  $region45: #{cgnet_forward.1} parent=0 // pred_fallthru
    _
  // Predicated region
  $region46: #{cgnet_forward.1} parent=0 // pred_check
    _
  $region47: #{cgnet_forward.1} parent=0 // pred_check_branch
    %738 = sbr.rel (0) target = $region49
  $region48: #{cgnet_forward.1} parent=0 // pred_region
    _
  $region49: #{cgnet_forward.1} parent=0 // pred_fallthru
    _
  // Predicated region
  $region50: #{cgnet_forward.1} parent=0 // pred_check
    _
  $region51: #{cgnet_forward.1} parent=0 // pred_check_branch
    %740 = sbr.rel (0) target = $region53
  $region52: #{cgnet_forward.1} parent=0 // pred_region
    _
  $region53: #{cgnet_forward.1} parent=0 // pred_fallthru
    _

</llo_original>
